<compile_context>
chip_gen: v5e
topology: v5e:2x2
jax: 0.10.0
libtpu: 0.0.40
codegen_flags: <defaults>
</compile_context>

<pallas_src>
import functools

import jax
import jax.numpy as jnp
import numpy as np
from jax.experimental import pallas as pl
from jax.experimental.pallas import tpu as pltpu

_NEG = -1e30          # large-negative stand-in for -inf (avoids inf-inf NaNs)
_IGNORE = -100
_OUT_LANES = 128


def _round_up(x, m):
    return -(-x // m) * m


def _vmem_bytes(tb, tv, S, H, row_chunk, out_lanes=_OUT_LANES):
    """VMEM plan for one grid step (double-buffering + lane padding included)."""
    M = tb * S
    M_pad = _round_up(M, 8)
    hidden = 2 * M_pad * H * 2            # (M,H) bf16: 2 buffers are allocated even
                                          # though the block index is constant over v
    emb = 2 * _round_up(H, 8) * tv * 2    # (H,tv) bf16 streamed tile, double-buffered
    labels = 2 * M_pad * 128 * 4          # (M,1) int32 lane-pads to 128
    out = 2 * _round_up(tb, 8) * out_lanes * 4
    scratch = 3 * M_pad * 128 * 4         # m / l / acc, each (M,1) lane-padded
    temps = 3 * row_chunk * tv * 4        # f32 logits + exp/select temporaries per chunk
    return hidden + emb + labels + out + scratch + temps


def _row_chunk_for(M, target=512):
    """Largest divisor of M that is <= target and a multiple of 8 (or M itself)."""
    if M <= target:
        return M
    for c in range(target, 7, -8):
        if M % c == 0:
            return c
    return M


def _vmem_capacity():
    try:
        return int(pltpu.get_tpu_info().vmem_capacity_bytes)
    except Exception:
        return 64 * 1024 * 1024   # v7x-sized fallback: safe on every generation


def _ce_kernel(hid_ref, embt_ref, lab_ref, out_ref, m_ref, l_ref, acc_ref, *,
               tv, v_real, v_pad, tb, seq_len, row_chunk, n_chunks, out_lanes):
    """One (batch-block, vocab-tile) grid step of shifted cross-entropy.

    hid_ref  : (M, H)       bf16  flattened (seq, pos) rows of hidden states
    embt_ref : (H, tv)      bf16  one vocab tile of the pre-transposed lm_head
    lab_ref  : (M, 1)       int32 shifted next-token labels (-100 = ignore)
    out_ref  : (tb, 128)    f32   per-SEQUENCE loss broadcast along lanes
    m/l/acc  : (M, 1)       f32   online-softmax state (max, sum-exp, label logit)
    """
    v = pl.program_id(1)
    n_v = pl.num_programs(1)

    @pl.when(v == 0)
    def _init():
        m_ref[...] = jnp.full_like(m_ref, _NEG)
        l_ref[...] = jnp.zeros_like(l_ref)
        acc_ref[...] = jnp.zeros_like(acc_ref)

    e = embt_ref[...]                                           # (H, tv) bf16
    # Hoisted (1, tv) iota; compared against (labels - v*tv) instead of
    # materializing a full (M, tv) int tile + add per step.
    col = jax.lax.broadcasted_iota(jnp.int32, (1, tv), 1)

    def process(row_start):
        rows = pl.ds(row_start, row_chunk)
        h = hid_ref[rows, :]                                    # (rc, H) bf16
        # lm_head (tied weights), canonical [M,K]@[K,N]; f32 accumulation on MXU.
        logits = jax.lax.dot_general(
            h, e, (((1,), (0,)), ((), ())),
            preferred_element_type=jnp.float32)                 # (rc, tv) f32
        if v_pad != v_real:
            # Zero-padded lm_head columns must not enter the logsumexp.
            logits = jnp.where(col + v * tv >= v_real, _NEG, logits)

        labels = lab_ref[rows, :]                               # (rc, 1) int32
        rel = labels - v * tv                                   # -100 never matches

        # --- online logsumexp update (all f32) ---
        m_prev = m_ref[rows, :]
        m_new = jnp.maximum(m_prev, jnp.max(logits, axis=-1, keepdims=True))
        l_ref[rows, :] = (l_ref[rows, :] * jnp.exp(m_prev - m_new)
                          + jnp.sum(jnp.exp(logits - m_new), axis=-1, keepdims=True))
        m_ref[rows, :] = m_new

        # --- logit at the label id: select, no one-hot materialized ---
        acc_ref[rows, :] = acc_ref[rows, :] + jnp.sum(
            jnp.where(col == rel, logits, 0.0), axis=-1, keepdims=True)

    if n_chunks == 1:
        process(0)
    else:
        # Chunk the M rows to bound the f32 logits temporaries / vreg pressure.
        @pl.loop(0, n_chunks)
        def _chunks(c):
            process(pl.multiple_of(c * row_chunk, row_chunk))

    @pl.when(v == n_v - 1)
    def _finalize():
        valid = (lab_ref[...] != _IGNORE).astype(jnp.float32)
        per_token = (m_ref[...] + jnp.log(l_ref[...]) - acc_ref[...]) * valid  # (M,1)
        # Per-sequence sum inside the kernel: cuts output writes / VMEM by S.
        for i in range(tb):                                     # static, small unroll
            seq = per_token[i * seq_len:(i + 1) * seq_len, :]   # (S, 1)
            s = jnp.sum(seq, axis=0, keepdims=True)             # (1, 1)
            out_ref[i:i + 1, :] = jnp.broadcast_to(s, (1, out_lanes))


def multi_theta_loss(hidden, emb, labels, *, tv=None, tb=None, row_chunk=None):
    """Per-sequence normalized shifted-CE loss, shape (B,) float32.

    hidden : (B, S, H) f32 hidden states (last transformer layer output)
    emb    : (V, H)    f32 tied embedding / lm_head weight
    labels : (B, S)    int labels, -100 = ignore
    """
    B, S, H = hidden.shape
    V = emb.shape[0]

    cap = _vmem_capacity()
    budget = int(cap * 0.75)

    if tv is None:
        # Keep tv a multiple of 256 when V permits (v6e/v7x MXU N-dim); a
        # multiple of 128 suffices on v5e.  Grow it manually on v6e (128 MiB
        # VMEM) if the _vmem_bytes plan leaves headroom.
        tv = 512 if V >= 512 else _round_up(V, 128)
    assert tv % 128 == 0, "tv must be a multiple of 128 (lane width)"
    v_pad = _round_up(V, tv)

    if tb is None:
        divs = [d for d in range(1, B + 1)
                if B % d == 0 and (d == B or d % 8 == 0)]
        divs.sort(reverse=True)
        tb = divs[0]                       # whole batch: max emb-tile reuse (v5e/v6e)
        # v7x has 2 TensorCores: prefer >= 2 parallel batch blocks as long as each
        # block keeps >= ~1024 rows (stays above the per-TC HBM roofline).
        for d in divs:
            if d < B and d * S >= 1024:
                tb = d
                break
        # Shrink further until the VMEM plan fits the budget.
        idx = divs.index(tb)
        while (idx + 1 < len(divs)
               and _vmem_bytes(tb, tv, S, H, _row_chunk_for(tb * S)) > budget):
            idx += 1
            tb = divs[idx]
    assert B % tb == 0 and (tb == B or tb % 8 == 0)

    M = tb * S
    assert M % 8 == 0 or tb == B, "rows per block must be sublane aligned"
    if row_chunk is None:
        row_chunk = _row_chunk_for(M)
    assert M % row_chunk == 0
    n_chunks = M // row_chunk

    need = _vmem_bytes(tb, tv, S, H, row_chunk)
    vmem_limit = int(min(0.9 * cap, max(1.4 * need, 32 * 1024 * 1024)))

    # Operand prep (bf16 into the MXU, halved HBM traffic; f32 accumulation inside).
    # TODO(synk): in a real training step the bf16, pre-transposed lm_head table
    # should be built once and reused across calls instead of recast/transposed
    # here (saves an f32 read + bf16 write of the full embedding per step).
    hid2 = hidden.reshape(B * S, H).astype(jnp.bfloat16)
    emb_t = jnp.transpose(emb.astype(jnp.bfloat16))             # (H, V), canonical [K,N]
    if v_pad != V:
        emb_t = jnp.pad(emb_t, ((0, 0), (0, v_pad - V)))        # padded ids masked in-kernel
    # Shifted next-token labels; last position of each sequence has no target.
    shift = jnp.concatenate(
        [labels[:, 1:], jnp.full((B, 1), _IGNORE, labels.dtype)], axis=1)
    lab_col = shift.reshape(B * S, 1).astype(jnp.int32)

    kernel = functools.partial(
        _ce_kernel, tv=tv, v_real=V, v_pad=v_pad, tb=tb, seq_len=S,
        row_chunk=row_chunk, n_chunks=n_chunks, out_lanes=_OUT_LANES)

    per_seq = pl.pallas_call(
        kernel,
        out_shape=jax.ShapeDtypeStruct((B, _OUT_LANES), jnp.float32),
        grid_spec=pltpu.PrefetchScalarGridSpec(
            num_scalar_prefetch=0,
            grid=(B // tb, v_pad // tv),        # vocab reduction axis innermost
            in_specs=[
                pl.BlockSpec((M, H), lambda b, v: (b, 0)),     # hidden: resident per b
                pl.BlockSpec((H, tv), lambda b, v: (0, v)),    # lm_head^T tile: streamed
                pl.BlockSpec((M, 1), lambda b, v: (b, 0)),     # shifted labels
            ],
            out_specs=pl.BlockSpec((tb, _OUT_LANES), lambda b, v: (b, 0)),
            scratch_shapes=[pltpu.VMEM((M, 1), jnp.float32)] * 3,
        ),
        compiler_params=pltpu.CompilerParams(
            dimension_semantics=("parallel", "arbitrary"),
            vmem_limit_bytes=vmem_limit),
    )(hid2, emb_t, lab_col)

    # PyTorch module normalizes the shifted per-token sum by the count of valid
    # UNSHIFTED labels; a sequence with zero valid labels yields inf/nan exactly
    # like the reference module (no extra guard, by design).
    n_valid = jnp.sum(labels != _IGNORE, axis=1).astype(jnp.float32)
    return per_seq[:, 0] / n_valid


def _ref_loss(hidden, emb, labels):
    """Pure-JAX reference mirroring the PyTorch forward (same bf16 operands)."""
    h = hidden.astype(jnp.bfloat16).astype(jnp.float32)
    e = emb.astype(jnp.bfloat16).astype(jnp.float32)
    logits = jnp.einsum("bsh,vh->bsv", h, e)
    shift_logits = logits[:, :-1, :]
    shift_labels = labels[:, 1:]
    lse = jax.scipy.special.logsumexp(shift_logits, axis=-1)
    gathered = jnp.take_along_axis(
        shift_logits, jnp.maximum(shift_labels, 0)[..., None], axis=-1)[..., 0]
    per_token = jnp.where(shift_labels != _IGNORE, lse - gathered, 0.0)
    per_seq = per_token.sum(axis=1)
    n_valid = (labels != _IGNORE).sum(axis=1).astype(jnp.float32)
    return per_seq / n_valid


if __name__ == "__main__":
    # Small, deterministic synthetic configuration.
    B, S, H = 2, 8, 32
    orig_vocab = 242
    n_cluster, n_prefix_tokens, n_tasks = 2, 2, 2
    n_tokens = n_cluster * n_prefix_tokens * n_tasks       # 8
    V = orig_vocab + n_tokens                               # 250: NOT a tile multiple,
                                                            # exercises in-kernel pad masking

    key = jax.random.PRNGKey(0)
    k_emb, k_ids = jax.random.split(key)

    # "Pretrained" embedding; resize_token_embeddings semantics: the n_tokens
    # new rows are copies of the first n_tokens original rows.
    E_orig = 0.02 * jax.random.normal(k_emb, (orig_vocab, H), dtype=jnp.float32)
    E_new = jnp.concatenate([E_orig, E_orig[:n_tokens]], axis=0)       # (V, H)

    input_ids = jax.random.randint(k_ids, (B, S), 0, V, dtype=jnp.int32)
    # First 3 positions are prompt (ignored in the loss, ignore_index=-100).
    pos = jnp.arange(S)[None, :]
    labels = jnp.where(pos < 3, _IGNORE, input_ids).astype(jnp.int32)

    # TODO(synk): hf_model transformer layers are external / not reproducible;
    # hidden states are approximated by the tied input-embedding lookup.
    hidden = E_new[input_ids]                                          # (B, S, H)

    # tv=128 -> 2 vocab tiles (online-logsumexp path) with 6 padded ids masked.
    loss = jax.block_until_ready(multi_theta_loss(hidden, E_new, labels, tv=128))
    ref = jax.block_until_ready(_ref_loss(hidden, E_new, labels))

    if not np.allclose(np.asarray(loss), np.asarray(ref), rtol=1e-3, atol=1e-3):
        raise AssertionError(f"mismatch: pallas={loss} ref={ref}")
    print("KERNEL_OK")
</pallas_src>

<mosaic_0001>
module attributes {stable_mosaic.version = 11 : i64} {
  func.func @_ce_kernel(%arg0: i32, %arg1: i32, %arg2: memref<16x32xbf16, #tpu.memory_space<vmem>>, %arg3: memref<32x128xbf16, #tpu.memory_space<vmem>>, %arg4: memref<16x1xi32, #tpu.memory_space<vmem>>, %arg5: memref<2x128xf32, #tpu.memory_space<vmem>>, %arg6: memref<16x1xf32, #tpu.memory_space<vmem>>, %arg7: memref<16x1xf32, #tpu.memory_space<vmem>>, %arg8: memref<16x1xf32, #tpu.memory_space<vmem>>) attributes {dimension_semantics = [#tpu.dimension_semantics<parallel>, #tpu.dimension_semantics<arbitrary>], iteration_bounds = array<i64: 1, 2>, scalar_prefetch = 0 : i64, scratch_operands = 3 : i64, tpu.core_type = #tpu.core_type<tc>, window_params = [{transform_indices = @transform_0, window_bounds = array<i64: 16, 32>}, {transform_indices = @transform_1, window_bounds = array<i64: 32, 128>}, {transform_indices = @transform_2, window_bounds = array<i64: 16, 1>}, {transform_indices = @transform_3, window_bounds = array<i64: 2, 128>}]} {
    %c0_i32 = arith.constant 0 : i32
    %0 = arith.cmpi eq, %arg1, %c0_i32 : i32
    %1 = arith.extui %0 : i1 to i32
    %c0_i32_0 = arith.constant 0 : i32
    %2 = arith.cmpi ne, %1, %c0_i32_0 : i32
    scf.if %2 {
      %cst_25 = arith.constant -1.000000e+30 : f32
      %49 = vector.broadcast %cst_25 : f32 to vector<16x1xf32>
      %c0_26 = arith.constant 0 : index
      %c0_27 = arith.constant 0 : index
      %50 = vector.load %arg6[%c0_26, %c0_27] : memref<16x1xf32, #tpu.memory_space<vmem>>, vector<16x1xf32>
      tpu.vector_store %arg6[%c0_26, %c0_27], %49 {strides = array<i32>} : memref<16x1xf32, #tpu.memory_space<vmem>>, vector<16x1xf32>,
      %cst_28 = arith.constant 0.000000e+00 : f32
      %51 = vector.broadcast %cst_28 : f32 to vector<16x1xf32>
      %c0_29 = arith.constant 0 : index
      %c0_30 = arith.constant 0 : index
      %52 = vector.load %arg7[%c0_29, %c0_30] : memref<16x1xf32, #tpu.memory_space<vmem>>, vector<16x1xf32>
      tpu.vector_store %arg7[%c0_29, %c0_30], %51 {strides = array<i32>} : memref<16x1xf32, #tpu.memory_space<vmem>>, vector<16x1xf32>,
      %cst_31 = arith.constant 0.000000e+00 : f32
      %53 = vector.broadcast %cst_31 : f32 to vector<16x1xf32>
      %c0_32 = arith.constant 0 : index
      %c0_33 = arith.constant 0 : index
      %54 = vector.load %arg8[%c0_32, %c0_33] : memref<16x1xf32, #tpu.memory_space<vmem>>, vector<16x1xf32>
      tpu.vector_store %arg8[%c0_32, %c0_33], %53 {strides = array<i32>} : memref<16x1xf32, #tpu.memory_space<vmem>>, vector<16x1xf32>,
    } else {
    }
    %c0 = arith.constant 0 : index
    %c0_1 = arith.constant 0 : index
    %3 = vector.load %arg3[%c0, %c0_1] : memref<32x128xbf16, #tpu.memory_space<vmem>>, vector<32x128xbf16>
    %4 = tpu.iota {dimensions = array<i32: 1>} : vector<1x128xi32>
    %c0_2 = arith.constant 0 : index
    %c0_3 = arith.constant 0 : index
    %5 = vector.load %arg2[%c0_2, %c0_3] : memref<16x32xbf16, #tpu.memory_space<vmem>>, vector<16x32xbf16>
    %cst = arith.constant dense<0.000000e+00> : vector<16x128xf32>
    %6 = tpu.matmul %5, %3, %cst {dimension_numbers = #tpu.dot_dimension_numbers<[1], [0], [0], [1], [0, 0, 1, 1], [], []>} : vector<16x32xbf16>, vector<32x128xbf16>, vector<16x128xf32> -> vector<16x128xf32>
    %c128_i32 = arith.constant 128 : i32
    %7 = arith.muli %arg1, %c128_i32 : i32
    %8 = vector.broadcast %7 : i32 to vector<1x128xi32>
    %9 = arith.addi %4, %8 : vector<1x128xi32>
    %c250_i32 = arith.constant 250 : i32
    %10 = vector.broadcast %c250_i32 : i32 to vector<1x128xi32>
    %11 = arith.cmpi sge, %9, %10 : vector<1x128xi32>
    %cst_4 = arith.constant -1.000000e+30 : f32
    %12 = vector.shape_cast %11 : vector<1x128xi1> to vector<1x128xi1>
    %13 = vector.broadcast %12 : vector<1x128xi1> to vector<16x128xi1>
    %14 = vector.broadcast %cst_4 : f32 to vector<16x128xf32>
    %15 = arith.select %13, %14, %6 : vector<16x128xi1>, vector<16x128xf32>
    %c0_5 = arith.constant 0 : index
    %c0_6 = arith.constant 0 : index
    %16 = vector.load %arg4[%c0_5, %c0_6] : memref<16x1xi32, #tpu.memory_space<vmem>>, vector<16x1xi32>
    %c128_i32_7 = arith.constant 128 : i32
    %17 = arith.muli %arg1, %c128_i32_7 : i32
    %18 = vector.broadcast %17 : i32 to vector<16x1xi32>
    %19 = arith.subi %16, %18 : vector<16x1xi32>
    %c0_8 = arith.constant 0 : index
    %c0_9 = arith.constant 0 : index
    %20 = vector.load %arg6[%c0_8, %c0_9] : memref<16x1xf32, #tpu.memory_space<vmem>>, vector<16x1xf32>
    %cst_10 = arith.constant dense<0xFF800000> : vector<16xf32>
    %21 = vector.multi_reduction <maximumf>, %15, %cst_10 [1] : vector<16x128xf32> to vector<16xf32>
    %22 = vector.shape_cast %21 : vector<16xf32> to vector<16x1xf32>
    %23 = arith.maximumf %20, %22 : vector<16x1xf32>
    %c0_11 = arith.constant 0 : index
    %c0_12 = arith.constant 0 : index
    %24 = vector.load %arg7[%c0_11, %c0_12] : memref<16x1xf32, #tpu.memory_space<vmem>>, vector<16x1xf32>
    %25 = arith.subf %20, %23 : vector<16x1xf32>
    %26 = math.exp %25 : vector<16x1xf32>
    %27 = arith.mulf %24, %26 : vector<16x1xf32>
    %28 = vector.broadcast %23 : vector<16x1xf32> to vector<16x128xf32>
    %29 = arith.subf %15, %28 : vector<16x128xf32>
    %30 = math.exp %29 : vector<16x128xf32>
    %cst_13 = arith.constant dense<0.000000e+00> : vector<16xf32>
    %31 = vector.multi_reduction <add>, %30, %cst_13 [1] : vector<16x128xf32> to vector<16xf32>
    %32 = vector.shape_cast %31 : vector<16xf32> to vector<16x1xf32>
    %33 = arith.addf %27, %32 : vector<16x1xf32>
    %c0_14 = arith.constant 0 : index
    %c0_15 = arith.constant 0 : index
    %34 = vector.load %arg7[%c0_14, %c0_15] : memref<16x1xf32, #tpu.memory_space<vmem>>, vector<16x1xf32>
    tpu.vector_store %arg7[%c0_14, %c0_15], %33 {strides = array<i32>} : memref<16x1xf32, #tpu.memory_space<vmem>>, vector<16x1xf32>,
    %c0_16 = arith.constant 0 : index
    %c0_17 = arith.constant 0 : index
    %35 = vector.load %arg6[%c0_16, %c0_17] : memref<16x1xf32, #tpu.memory_space<vmem>>, vector<16x1xf32>
    tpu.vector_store %arg6[%c0_16, %c0_17], %23 {strides = array<i32>} : memref<16x1xf32, #tpu.memory_space<vmem>>, vector<16x1xf32>,
    %c0_18 = arith.constant 0 : index
    %c0_19 = arith.constant 0 : index
    %36 = vector.load %arg8[%c0_18, %c0_19] : memref<16x1xf32, #tpu.memory_space<vmem>>, vector<16x1xf32>
    %37 = vector.broadcast %4 : vector<1x128xi32> to vector<16x128xi32>
    %38 = vector.broadcast %19 : vector<16x1xi32> to vector<16x128xi32>
    %39 = arith.cmpi eq, %37, %38 : vector<16x128xi32>
    %cst_20 = arith.constant 0.000000e+00 : f32
    %40 = vector.broadcast %cst_20 : f32 to vector<16x128xf32>
    %41 = arith.select %39, %15, %40 : vector<16x128xi1>, vector<16x128xf32>
    %cst_21 = arith.constant dense<0.000000e+00> : vector<16xf32>
    %42 = vector.multi_reduction <add>, %41, %cst_21 [1] : vector<16x128xf32> to vector<16xf32>
    %43 = vector.shape_cast %42 : vector<16xf32> to vector<16x1xf32>
    %44 = arith.addf %36, %43 : vector<16x1xf32>
    %c0_22 = arith.constant 0 : index
    %c0_23 = arith.constant 0 : index
    %45 = vector.load %arg8[%c0_22, %c0_23] : memref<16x1xf32, #tpu.memory_space<vmem>>, vector<16x1xf32>
    tpu.vector_store %arg8[%c0_22, %c0_23], %44 {strides = array<i32>} : memref<16x1xf32, #tpu.memory_space<vmem>>, vector<16x1xf32>,
    %c1_i32 = arith.constant 1 : i32
    %46 = arith.cmpi eq, %arg1, %c1_i32 : i32
    %47 = arith.extui %46 : i1 to i32
    %c0_i32_24 = arith.constant 0 : i32
    %48 = arith.cmpi ne, %47, %c0_i32_24 : i32
    scf.if %48 {
      %c0_25 = arith.constant 0 : index
      %c0_26 = arith.constant 0 : index
      %49 = vector.load %arg4[%c0_25, %c0_26] : memref<16x1xi32, #tpu.memory_space<vmem>>, vector<16x1xi32>
      %c-100_i32 = arith.constant -100 : i32
      %50 = vector.broadcast %c-100_i32 : i32 to vector<16x1xi32>
      %51 = arith.cmpi ne, %49, %50 : vector<16x1xi32>
      %52 = arith.extui %51 : vector<16x1xi1> to vector<16x1xi32>
      %53 = arith.sitofp %52 : vector<16x1xi32> to vector<16x1xf32>
      %c0_27 = arith.constant 0 : index
      %c0_28 = arith.constant 0 : index
      %54 = vector.load %arg6[%c0_27, %c0_28] : memref<16x1xf32, #tpu.memory_space<vmem>>, vector<16x1xf32>
      %c0_29 = arith.constant 0 : index
      %c0_30 = arith.constant 0 : index
      %55 = vector.load %arg7[%c0_29, %c0_30] : memref<16x1xf32, #tpu.memory_space<vmem>>, vector<16x1xf32>
      %56 = math.log %55 : vector<16x1xf32>
      %57 = arith.addf %54, %56 : vector<16x1xf32>
      %c0_31 = arith.constant 0 : index
      %c0_32 = arith.constant 0 : index
      %58 = vector.load %arg8[%c0_31, %c0_32] : memref<16x1xf32, #tpu.memory_space<vmem>>, vector<16x1xf32>
      %59 = arith.subf %57, %58 : vector<16x1xf32>
      %60 = arith.mulf %59, %53 : vector<16x1xf32>
      %61 = vector.extract_strided_slice %60 {offsets = [0, 0], sizes = [8, 1], strides = [1, 1]} : vector<16x1xf32> to vector<8x1xf32>
      %cst_33 = arith.constant dense<0.000000e+00> : vector<1xf32>
      %62 = vector.multi_reduction <add>, %61, %cst_33 [0] : vector<8x1xf32> to vector<1xf32>
      %63 = vector.shape_cast %62 : vector<1xf32> to vector<1x1xf32>
      %64 = vector.shape_cast %63 : vector<1x1xf32> to vector<1x1xf32>
      %65 = vector.broadcast %64 : vector<1x1xf32> to vector<1x128xf32>
      %c0_34 = arith.constant 0 : index
      %c0_35 = arith.constant 0 : index
      %66 = vector.load %arg5[%c0_34, %c0_35] : memref<2x128xf32, #tpu.memory_space<vmem>>, vector<1x128xf32>
      tpu.vector_store %arg5[%c0_34, %c0_35], %65 {strides = array<i32>} : memref<2x128xf32, #tpu.memory_space<vmem>>, vector<1x128xf32>,
      %67 = vector.extract_strided_slice %60 {offsets = [8, 0], sizes = [8, 1], strides = [1, 1]} : vector<16x1xf32> to vector<8x1xf32>
      %cst_36 = arith.constant dense<0.000000e+00> : vector<1xf32>
      %68 = vector.multi_reduction <add>, %67, %cst_36 [0] : vector<8x1xf32> to vector<1xf32>
      %69 = vector.shape_cast %68 : vector<1xf32> to vector<1x1xf32>
      %70 = vector.shape_cast %69 : vector<1x1xf32> to vector<1x1xf32>
      %71 = vector.broadcast %70 : vector<1x1xf32> to vector<1x128xf32>
      %c1 = arith.constant 1 : index
      %c0_37 = arith.constant 0 : index
      %72 = vector.load %arg5[%c1, %c0_37] : memref<2x128xf32, #tpu.memory_space<vmem>>, vector<1x128xf32>
      tpu.vector_store %arg5[%c1, %c0_37], %71 {strides = array<i32>} : memref<2x128xf32, #tpu.memory_space<vmem>>, vector<1x128xf32>,
    } else {
    }
    return
  }
  func.func @transform_0(%arg0: i32, %arg1: i32) -> (i32, i32) {
    %c0_i32 = arith.constant 0 : i32
    %c0_i32_0 = arith.constant 0 : i32
    return %arg0, %c0_i32 : i32, i32
  }
  func.func @transform_1(%arg0: i32, %arg1: i32) -> (i32, i32) {
    %c0_i32 = arith.constant 0 : i32
    %c0_i32_0 = arith.constant 0 : i32
    return %c0_i32, %arg1 : i32, i32
  }
  func.func @transform_2(%arg0: i32, %arg1: i32) -> (i32, i32) {
    %c0_i32 = arith.constant 0 : i32
    %c0_i32_0 = arith.constant 0 : i32
    return %arg0, %c0_i32 : i32, i32
  }
  func.func @transform_3(%arg0: i32, %arg1: i32) -> (i32, i32) {
    %c0_i32 = arith.constant 0 : i32
    %c0_i32_0 = arith.constant 0 : i32
    return %arg0, %c0_i32 : i32, i32
  }
}

</mosaic_0001>

<llo_original>
// kernel: tpu_custom_call.1
$region0: #{tpu_custom_call.1}
  #allocation0 [shape = 'u32[]', space=smem, size = 0x4, offset = 0x4, fixed_abs, tag = 'smem constant byte address 0x4 - core index']
  #allocation1 [shape = 'u32[72,128]{1,0:T(1,128)}', space=vmem, size = 0x9000, scoped, tag = 'internal scratch']
  #allocation2 [shape = 'f32[16,1]{1,0:T(8,128)}', space=vmem, size = 0x2000, scoped, tag = 'scratch operand']
  #allocation3 [shape = 'f32[16,1]{1,0:T(8,128)}', space=vmem, size = 0x2000, scoped, tag = 'scratch operand']
  #allocation4 [shape = 'f32[16,1]{1,0:T(8,128)}', space=vmem, size = 0x2000, scoped, tag = 'scratch operand']
  %s0 = inlined_call_operand.vmem [shape: bf16[16,32], index: 0, kind: input, shape index: {}]
  %s1 = inlined_call_operand.hbm [shape: bf16[32,256], index: 1, kind: input, shape index: {}]
  %s2 = inlined_call_operand.vmem [shape: s32[16,1], index: 2, kind: input, shape index: {}]
  %s3 = inlined_call_operand.hbm [shape: f32[2,128], index: 3, kind: output, shape index: {}]
  %s4 = sld [smem:[#allocation0]]
  $region57: #{tpu_custom_call.1} parent=0
    _
  %s6 = ssub.s32 1, %s4
  %s7 = scalar_select 0, %s6, %s4
  $region1: #{tpu_custom_call.1} parent=0
    #allocation5 [shape = 'u8[16384]{0}', space=vmem, size = 0x4000, scoped, tag = 'input window, operand 1']
    #allocation6 [shape = 's32[2]{0}', space=sflag, size = 0x8, scoped, tag = 'scoped memory for tpu_custom_call.1']
    #allocation7 [shape = 's32[2]{0}', space=sflag, size = 0x8, scoped, tag = 'scoped memory for tpu_custom_call.1']
    #allocation8 [shape = 'u8[1024]{0}', space=vmem, size = 0x400, scoped, tag = 'output window, operand 0, single buffered']
    %8 = vsyncpa [#allocation6], 0
    %s9 = scalar_lea.sflag [#allocation6], 1
    %10 = vsyncpa %s9, 0
    %11 = vsyncpa [#allocation7], 0
    loop: start=0, step=1, limit=4
    $region2: #{tpu_custom_call.1} parent=1 // loop_pre_header
      _
    $region3: #{tpu_custom_call.1} parent=1 // loop_header
      %s13 = sphi 0, %s17
      %p14 = scmp.ge.s32.totalorder %s13, 4
      %s20 = sphi 0, %s32
      %s21 = sphi 0, %s28
      %s22 = sphi 0, %s20
      %s23 = sphi 0, %s21
      %s24 = sphi 0, %s22
      %s25 = sphi 0, %s23
      %s35 = sphi 0, %s37
      %s38 = sphi 0, %s35
      %s39 = sphi 0, %s38
      %s55 = sphi 0, %s39
      %s61 = sphi 0, %s63
      %s64 = sphi 0, %s61
      %s65 = sphi 0, %s64
      %s81 = sphi 0, %s65
      %s87 = sphi 0, %s89
      %s90 = sphi 0, %s87
      %s91 = sphi 0, %s90
      %s107 = sphi 0, %s91
      %s113 = sphi 0, %s115
      %s116 = sphi 0, %s113
      %s117 = sphi 0, %s116
      %s133 = sphi 0, %s117
    $region4: #{tpu_custom_call.1} parent=1 // loop_header_branch
      %16 = sbr.rel (%p14) target = $region8
    $region5: #{tpu_custom_call.1} parent=1 // loop_body
      %s18 = ssub.s32 %s13, 1
      %s19 = ssub.s32 %s13, 2
      %s26 = sadd.s32 1, %s21
      %p27 = scmp.ge.s32.totalorder %s26, 2
      %s28 = scalar_select %p27, 0, %s26
      %s29 = sadd.s32 1, %s20
      %s30 = scalar_select %p27, %s29, %s20
      %p31 = scmp.ge.s32.totalorder %s30, 1
      %s32 = scalar_select %p31, 0, %s30
      %s33 = ssub.s32 %s20, %s32
      %p34 = scmp.eq.s32.totalorder %s33, 0
      %s36 = sadd.s32 %s35, 1
      %s37 = scalar_select %p34, %s35, %s36
      %p40 = pneg %p34
      %p41 = scmp.eq.s32.totalorder %s13, 1
      %p42 = por %p40, %p41
      %p43 = scmp.ne.s32.totalorder %s35, %s38
      %p44 = scmp.eq.s32.totalorder %s13, 0
      %p45 = por %p43, %p44
      %p46 = scmp.ne.s32.totalorder %s35, %s38
      %p47 = scmp.eq.s32.totalorder %s18, 1
      %p48 = por %p46, %p47
      %p49 = scmp.ne.s32.totalorder %s38, %s39
      %p50 = scmp.eq.s32.totalorder %s18, 0
      %p51 = por %p49, %p50
      %p52 = scmp.ne.s32.totalorder %s38, %s39
      %p53 = scmp.eq.s32.totalorder %s19, 1
      %p54 = por %p52, %p53
      %p56 = scmp.ne.s32.totalorder %s39, %s55
      %p57 = scmp.eq.s32.totalorder %s19, 0
      %p58 = por %p56, %p57
      %s59 = ssub.s32 %s21, %s28
      %p60 = scmp.eq.s32.totalorder %s59, 0
      %s62 = sadd.s32 %s61, 1
      %s63 = scalar_select %p60, %s61, %s62
      %p66 = pneg %p60
      %p67 = scmp.eq.s32.totalorder %s13, 1
      %p68 = por %p66, %p67
      %p69 = scmp.ne.s32.totalorder %s61, %s64
      %p70 = scmp.eq.s32.totalorder %s13, 0
      %p71 = por %p69, %p70
      %p72 = scmp.ne.s32.totalorder %s61, %s64
      %p73 = scmp.eq.s32.totalorder %s18, 1
      %p74 = por %p72, %p73
      %p75 = scmp.ne.s32.totalorder %s64, %s65
      %p76 = scmp.eq.s32.totalorder %s18, 0
      %p77 = por %p75, %p76
      %p78 = scmp.ne.s32.totalorder %s64, %s65
      %p79 = scmp.eq.s32.totalorder %s19, 1
      %p80 = por %p78, %p79
      %p82 = scmp.ne.s32.totalorder %s65, %s81
      %p83 = scmp.eq.s32.totalorder %s19, 0
      %p84 = por %p82, %p83
      %s85 = ssub.s32 %s20, %s32
      %p86 = scmp.eq.s32.totalorder %s85, 0
      %s88 = sadd.s32 %s87, 1
      %s89 = scalar_select %p86, %s87, %s88
      %p92 = pneg %p86
      %p93 = scmp.eq.s32.totalorder %s13, 1
      %p94 = por %p92, %p93
      %p95 = scmp.ne.s32.totalorder %s87, %s90
      %p96 = scmp.eq.s32.totalorder %s13, 0
      %p97 = por %p95, %p96
      %p98 = scmp.ne.s32.totalorder %s87, %s90
      %p99 = scmp.eq.s32.totalorder %s18, 1
      %p100 = por %p98, %p99
      %p101 = scmp.ne.s32.totalorder %s90, %s91
      %p102 = scmp.eq.s32.totalorder %s18, 0
      %p103 = por %p101, %p102
      %p104 = scmp.ne.s32.totalorder %s90, %s91
      %p105 = scmp.eq.s32.totalorder %s19, 1
      %p106 = por %p104, %p105
      %p108 = scmp.ne.s32.totalorder %s91, %s107
      %p109 = scmp.eq.s32.totalorder %s19, 0
      %p110 = por %p108, %p109
      %s111 = ssub.s32 %s20, %s32
      %p112 = scmp.eq.s32.totalorder %s111, 0
      %s114 = sadd.s32 %s113, 1
      %s115 = scalar_select %p112, %s113, %s114
      %p118 = pneg %p112
      %p119 = scmp.eq.s32.totalorder %s13, 1
      %p120 = por %p118, %p119
      %p121 = scmp.ne.s32.totalorder %s113, %s116
      %p122 = scmp.eq.s32.totalorder %s13, 0
      %p123 = por %p121, %p122
      %p124 = scmp.ne.s32.totalorder %s113, %s116
      %p125 = scmp.eq.s32.totalorder %s18, 1
      %p126 = por %p124, %p125
      %p127 = scmp.ne.s32.totalorder %s116, %s117
      %p128 = scmp.eq.s32.totalorder %s18, 0
      %p129 = por %p127, %p128
      %p130 = scmp.ne.s32.totalorder %s116, %s117
      %p131 = scmp.eq.s32.totalorder %s19, 1
      %p132 = por %p130, %p131
      %p134 = scmp.ne.s32.totalorder %s117, %s133
      %p135 = scmp.eq.s32.totalorder %s19, 0
      %p136 = por %p134, %p135
      %p137 = scmp.le.s32.totalorder 1, %s13
      %p138 = scmp.lt.s32.totalorder %s13, 3
      %p139 = pnand %p137, %p138
      %p140 = pneg %p139
      // Predicated region
      $region9: #{tpu_custom_call.1} parent=5 // pred_check
        _
      $region10: #{tpu_custom_call.1} parent=5 // pred_check_branch
        %142 = sbr.rel (%p139) target = $region12
      $region11: #{tpu_custom_call.1} parent=5 // pred_region
        %s143 = ssub.s32 %s13, 1
        // Predicated region
        $region13: #{tpu_custom_call.1} parent=11 // pred_check
          %p144 = pneg %p51
        $region14: #{tpu_custom_call.1} parent=11 // pred_check_branch
          %146 = sbr.rel (%p144) target = $region16
        $region15: #{tpu_custom_call.1} parent=11 // pred_region
          %s147 = smul.u32 2, %s22
          %p148 = scmp.lt.s32.totalorder %s147, 1
          %s149 = scalar_select %p148, %s147, 1
          %s150 = smul.addr %s149, 4
          %s151 = scalar_lea.vmem %s0, %s150
          %s152 = smul.u32 2, %s22
        $region16: #{tpu_custom_call.1} parent=11 // pred_fallthru
          _
        // Predicated region
        $region17: #{tpu_custom_call.1} parent=11 // pred_check
          %p153 = pneg %p103
        $region18: #{tpu_custom_call.1} parent=11 // pred_check_branch
          %155 = sbr.rel (%p153) target = $region20
        $region19: #{tpu_custom_call.1} parent=11 // pred_region
          %s156 = smul.u32 2, %s22
          %p157 = scmp.lt.s32.totalorder %s156, 1
          %s158 = scalar_select %p157, %s156, 1
          %s159 = smul.addr %s158, 8
          %s160 = scalar_lea.vmem %s2, %s159
          %s161 = smul.u32 2, %s22
        $region20: #{tpu_custom_call.1} parent=11 // pred_fallthru
          _
      $region12: #{tpu_custom_call.1} parent=5 // pred_fallthru
        _
      %p162 = scmp.lt.s32.totalorder %s13, 2
      // Predicated region
      $region21: #{tpu_custom_call.1} parent=5 // pred_check
        %p163 = pneg %p162
      $region22: #{tpu_custom_call.1} parent=5 // pred_check_branch
        %165 = sbr.rel (%p163) target = $region24
      $region23: #{tpu_custom_call.1} parent=5 // pred_region
        // Predicated region
        $region25: #{tpu_custom_call.1} parent=23 // pred_check
          %p166 = pneg %p71
        $region26: #{tpu_custom_call.1} parent=23 // pred_check_branch
          %168 = sbr.rel (%p166) target = $region28
        $region27: #{tpu_custom_call.1} parent=23 // pred_region
          %s169 = sand.u32 %s61, 1
          %s170 = scalar_lea.sflag [#allocation6], %s169
          %s171 = sand.u32 %s61, 1
          %s172 = smul.addr %s171, 16
          %s173 = scalar_lea.vmem [#allocation5], %s172
          %175 = vsyncadd %s170, 0
          %s176 = smul.addr %s21, 4
          %s177 = scalar_lea.hbm %s1, %s176
          %s178 = sshll.u32 %s177, 4
          %s179 = int_to_ptr.hbm [resolvable:$true] %s178
          %s180 = sshll.u32 %s173, 4
          %s181 = int_to_ptr.vmem [resolvable:$true] %s180
          %186 = dma.hbm_to_vmem [thread:$0]  %s179, 256, %s181, %s170, 128, 64, 4
        $region28: #{tpu_custom_call.1} parent=23 // pred_fallthru
          _
      $region24: #{tpu_custom_call.1} parent=5 // pred_fallthru
        _
      %p187 = scmp.le.s32.totalorder 1, %s13
      %p188 = scmp.lt.s32.totalorder %s13, 3
      %p189 = pnand %p187, %p188
      %p190 = pneg %p189
      // Predicated region
      $region29: #{tpu_custom_call.1} parent=5 // pred_check
        _
      $region30: #{tpu_custom_call.1} parent=5 // pred_check_branch
        %192 = sbr.rel (%p189) target = $region32
      $region31: #{tpu_custom_call.1} parent=5 // pred_region
        %s193 = ssub.s32 %s13, 1
        %s194 = sand.u32 %s64, 1
        %s195 = scalar_lea.sflag [#allocation6], %s194
        %s196 = sand.u32 %s64, 1
        %s197 = smul.addr %s196, 16
        %s198 = scalar_lea.vmem [#allocation5], %s197
        // Predicated region
        $region33: #{tpu_custom_call.1} parent=31 // pred_check
          %p199 = pneg %p77
        $region34: #{tpu_custom_call.1} parent=31 // pred_check_branch
          %201 = sbr.rel (%p199) target = $region36
        $region35: #{tpu_custom_call.1} parent=31 // pred_region
          %203 = dma.done %s195, 256
        $region36: #{tpu_custom_call.1} parent=31 // pred_fallthru
          _
        %s204 = smul.u32 2, %s22
        %p205 = scmp.lt.s32.totalorder %s204, 1
        %s206 = scalar_select %p205, %s204, 1
        %s207 = smul.addr %s206, 4
        %s208 = scalar_lea.vmem %s0, %s207
        %p209 = pneg %p51
        %p210 = pneg %p48
        %s211 = sand.u32 %s64, 1
        %s212 = scalar_lea.sflag [#allocation6], %s211
        %s213 = sand.u32 %s64, 1
        %s214 = smul.addr %s213, 16
        %s215 = scalar_lea.vmem [#allocation5], %s214
        %p216 = pneg %p77
        %p217 = pneg %p74
        %s218 = smul.u32 2, %s22
        %p219 = scmp.lt.s32.totalorder %s218, 1
        %s220 = scalar_select %p219, %s218, 1
        %s221 = smul.addr %s220, 8
        %s222 = scalar_lea.vmem %s2, %s221
        %p223 = pneg %p103
        %p224 = pneg %p100
        %p225 = pneg %p129
        %p226 = pneg %p126
        %s227 = smul.u32 2, %s22
        %p228 = scmp.lt.s32.totalorder %s227, 1
        %s229 = scalar_select %p228, %s227, 1
        %s230 = smul.addr %s229, 4
        %s231 = scalar_lea.vmem %s0, %s230
        %s232 = smul.u32 2, %s22
        %s233 = smul.u32 2, %s22
        %p234 = scmp.lt.s32.totalorder %s233, 1
        %s235 = scalar_select %p234, %s233, 1
        %s236 = smul.addr %s235, 8
        %s237 = scalar_lea.vmem %s2, %s236
        %s238 = smul.u32 2, %s22
        %p240 = scmp.eq.s32.totalorder %s23, 0
        // Predicated region
        $region37: #{tpu_custom_call.1} parent=31 // pred_check
          %p241 = pneg %p240
        $region38: #{tpu_custom_call.1} parent=31 // pred_check_branch
          %243 = sbr.rel (%p241) target = $region40
        $region39: #{tpu_custom_call.1} parent=31 // pred_region
          %vm244 = vcmask 7168
          %245 = vst.msk [vmem:[#allocation2] sm:$0xff] %vm244, -1e+30
          %246 = vst.msk [vmem:[#allocation2 + $0x8] sm:$0xff] %vm244, -1e+30
          %247 = vst.msk [vmem:[#allocation3] sm:$0xff] %vm244, 0.0
          %248 = vst.msk [vmem:[#allocation3 + $0x8] sm:$0xff] %vm244, 0.0
          %249 = vst.msk [vmem:[#allocation4] sm:$0xff] %vm244, 0.0
          %250 = vst.msk [vmem:[#allocation4 + $0x8] sm:$0xff] %vm244, 0.0
        $region40: #{tpu_custom_call.1} parent=31 // pred_fallthru
          _
        %v251 = vld [vmem:[%s198] sm:$0xf]
        %v252 = vld [vmem:[%s198 + $0x4] sm:$0xf]
        %v253 = vld [vmem:[%s198 + $0x8] sm:$0xf]
        %v254 = vld [vmem:[%s198 + $0xc] sm:$0xf]
        %v255 = vlaneseq
        %v256 = vand.u32 %v255, 127
        %v257 = vld [vmem:[%s231] sm:$0xf]
        %v258 = vld [vmem:[%s231 + $0x4] sm:$0xf]
        %v261 = vunpack.c.l.b16 %v257
        %v262 = vunpack.c.l.b16 %v258
        %v263 = vpack.c.b16 %v262, %v261
        %v268 = vunpack.c.l.b16 %v251
        %v269 = vunpack.c.l.b16 %v252
        %v270 = vunpack.c.l.b16 %v253
        %v271 = vunpack.c.l.b16 %v254
        %v272 = vpack.c.b16 %v269, %v268
        %v273 = vpack.c.b16 %v271, %v270
        %vm276 = vcmask 261120
        %v278 = vsel %vm276, %v263, 0
        %280 = vmatpush.bf16.msra.mxu0 0
        %281 = vmatpush.bf16.msra.mxu0 0
        %282 = vmatpush.bf16.msra.mxu0 0
        %283 = vmatpush.bf16.msra.mxu0 0
        %284 = vmatpush.bf16.msra.mxu0 0
        %285 = vmatpush.bf16.msra.mxu0 0
        %286 = vmatpush.bf16.msra.mxu0 %v273
        %287 = vmatpush.bf16.msra.mxu0 %v272
        %288 = vmatmul.bf16.gmra.mxu0 %v278
        %v289 = vpop.f32.mrf.mxu0
        %v290 = vadd.f32 0.0, %v289
        %v291 = vpop.f32.mrf.mxu0
        %v292 = vadd.f32 0.0, %v291
        %293 = vdwg.mxu0
        %s294 = smul.u32 %s23, 128
        %v295 = vstv %s294
        %v296 = vadd.s32 %v256, %v295
        %vm297 = vcmp.ge.s32.totalorder %v296, 250
        %v298 = vsel %vm297, 1, 0
        %vm299 = vcmp.eq.s32.totalorder %v298, 1
        %v300 = vsel %vm299, -1e+30, %v290
        %v301 = vsel %vm299, -1e+30, %v292
        %v302 = vld [vmem:[%s237] sm:$0xff]
        %v303 = vld [vmem:[%s237 + $0x8] sm:$0xff]
        %v304 = vsub.s32 %v302, %v295
        %v305 = vsub.s32 %v303, %v295
        %v306 = vld [vmem:[#allocation2] sm:$0xff]
        %v307 = vld [vmem:[#allocation2 + $0x8] sm:$0xff]
        %308 = vmax.xlane.f32.xlu0 %v300
        %v309 = vpop.xlane.xlu0 %308
        %310 = vmax.xlane.f32.xlu0 %v301
        %v311 = vpop.xlane.xlu0 %310
        %v312 = vmax.f32 %v306, %v309
        %v313 = vmax.f32 %v307, %v311
        %v314 = vld [vmem:[#allocation3] sm:$0xff]
        %v315 = vld [vmem:[#allocation3 + $0x8] sm:$0xff]
        %v316 = vsub.f32 %v306, %v312
        %v317 = vsub.f32 %v307, %v313
        %v318 = vmul.f32 %v316, 1.442695
        %v319 = vpow.pop %v318
        %v320 = vmul.f32 %v317, 1.442695
        %v321 = vpow.pop %v320
        %v322 = vmul.f32 %v314, %v319
        %v323 = vmul.f32 %v315, %v321
        %325 = vset.pattern.permute.xlu0 0
        %326 = vperm.xlu0 %325, %v312
        %v327 = vpop.permute.xlu0 %326
        %330 = vset.pattern.permute.xlu0 0
        %331 = vperm.xlu0 %330, %v313
        %v332 = vpop.permute.xlu0 %331
        %v334 = vsub.f32 %v300, %v327
        %v335 = vsub.f32 %v301, %v332
        %v336 = vmul.f32 %v334, 1.442695
        %v337 = vpow.pop %v336
        %v338 = vmul.f32 %v335, 1.442695
        %v339 = vpow.pop %v338
        %340 = vadd.xlane.f32.xlu0 %v337
        %v341 = vpop.xlane.xlu0 %340
        %342 = vadd.xlane.f32.xlu0 %v339
        %v343 = vpop.xlane.xlu0 %342
        %v344 = vadd.f32 %v322, %v341
        %v345 = vadd.f32 %v323, %v343
        %vm346 = vcmask 7168
        %347 = vst.msk [vmem:[#allocation3] sm:$0xff] %vm346, %v344
        %348 = vst.msk [vmem:[#allocation3 + $0x8] sm:$0xff] %vm346, %v345
        %349 = vst.msk [vmem:[#allocation2] sm:$0xff] %vm346, %v312
        %350 = vst.msk [vmem:[#allocation2 + $0x8] sm:$0xff] %vm346, %v313
        %v351 = vld [vmem:[#allocation4] sm:$0xff]
        %v352 = vld [vmem:[#allocation4 + $0x8] sm:$0xff]
        %353 = vset.pattern.permute.xlu0 0
        %354 = vperm.xlu0 %353, %v304
        %v355 = vpop.permute.xlu0 %354
        %356 = vset.pattern.permute.xlu0 0
        %357 = vperm.xlu0 %356, %v305
        %v358 = vpop.permute.xlu0 %357
        %vm359 = vcmp.eq.s32.totalorder %v256, %v355
        %vm360 = vcmp.eq.s32.totalorder %v256, %v358
        %v361 = vsel %vm359, %v300, 0.0
        %v362 = vsel %vm360, %v301, 0.0
        %363 = vadd.xlane.f32.xlu0 %v361
        %v364 = vpop.xlane.xlu0 %363
        %365 = vadd.xlane.f32.xlu0 %v362
        %v366 = vpop.xlane.xlu0 %365
        %v367 = vadd.f32 %v351, %v364
        %v368 = vadd.f32 %v352, %v366
        %369 = vst.msk [vmem:[#allocation4] sm:$0xff] %vm346, %v367
        %370 = vst.msk [vmem:[#allocation4 + $0x8] sm:$0xff] %vm346, %v368
        %p371 = scmp.eq.s32.totalorder %s23, 1
        // Predicated region
        $region41: #{tpu_custom_call.1} parent=31 // pred_check
          %p372 = pneg %p371
        $region42: #{tpu_custom_call.1} parent=31 // pred_check_branch
          %374 = sbr.rel (%p372) target = $region44
        $region43: #{tpu_custom_call.1} parent=31 // pred_region
          %v375 = vld [vmem:[%s237] sm:$0xff]
          %v376 = vld [vmem:[%s237 + $0x8] sm:$0xff]
          %vm377 = vcmp.ne.s32.totalorder %v375, 4294967196
          %vm378 = vcmp.ne.s32.totalorder %v376, 4294967196
          %v379 = vsel %vm377, 1, 0
          %v380 = vsel %vm378, 1, 0
          %v381 = vcvt.s32.f32 %v379
          %v382 = vcvt.s32.f32 %v380
          %v383 = vld [vmem:[#allocation2] sm:$0xff]
          %v384 = vld [vmem:[#allocation2 + $0x8] sm:$0xff]
          %v385 = vld [vmem:[#allocation3] sm:$0xff]
          %v386 = vld [vmem:[#allocation3 + $0x8] sm:$0xff]
          %v387 = vlog2.pop %v385
          %v388 = vmul.f32 %v387, 0.6931472
          %v389 = vlog2.pop %v386
          %v390 = vmul.f32 %v389, 0.6931472
          %v391 = vadd.f32 %v383, %v388
          %v392 = vadd.f32 %v384, %v390
          %v393 = vld [vmem:[#allocation4] sm:$0xff]
          %v394 = vld [vmem:[#allocation4 + $0x8] sm:$0xff]
          %v395 = vsub.f32 %v391, %v393
          %v396 = vsub.f32 %v392, %v394
          %v397 = vmul.f32 %v395, %v381
          %v398 = vmul.f32 %v396, %v382
          %v399 = vsel %vm346, %v397, 0.0
          %v400 = vrot.slane %v399, 4
          %v401 = vadd.f32 %v399, %v400
          %v402 = vrot.slane %v401, 2
          %v403 = vadd.f32 %v401, %v402
          %v404 = vrot.slane %v403, 1
          %v405 = vadd.f32 %v403, %v404
          %407 = vset.pattern.permute.xlu0 0
          %408 = vperm.xlu0 %407, %v405
          %v409 = vpop.permute.xlu0 %408
          %411 = vst [vmem:[#allocation8] sm:$0x1] %v409
          %v412 = vsel %vm346, %v398, 0.0
          %v413 = vrot.slane %v412, 4
          %v414 = vadd.f32 %v412, %v413
          %v415 = vrot.slane %v414, 2
          %v416 = vadd.f32 %v414, %v415
          %v417 = vrot.slane %v416, 1
          %v418 = vadd.f32 %v416, %v417
          %420 = vset.pattern.permute.xlu0 0
          %421 = vperm.xlu0 %420, %v418
          %v422 = vpop.permute.xlu0 %421
          %424 = vst [vmem:[#allocation8 + $0x1] sm:$0x1] %v422
        $region44: #{tpu_custom_call.1} parent=31 // pred_fallthru
          _
        // Predicated region
        $region45: #{tpu_custom_call.1} parent=31 // pred_check
          %p425 = pneg %p126
        $region46: #{tpu_custom_call.1} parent=31 // pred_check_branch
          %427 = sbr.rel (%p425) target = $region48
        $region47: #{tpu_custom_call.1} parent=31 // pred_region
          %429 = vsyncadd [#allocation7], 0
          %s430 = smul.addr %s22, 2
          %s431 = scalar_lea.hbm %s3, %s430
          %s433 = sshll.u32 [#allocation8], 4
          %s434 = int_to_ptr.vmem [resolvable:$true] %s433
          %s435 = sshll.u32 %s431, 4
          %s436 = int_to_ptr.hbm [resolvable:$true] %s435
          %438 = dma.vmem_to_hbm [thread:$0]  %s434, 32, %s436, [#allocation7]
        $region48: #{tpu_custom_call.1} parent=31 // pred_fallthru
          _
        // Predicated region
        $region49: #{tpu_custom_call.1} parent=31 // pred_check
          %p439 = pneg %p126
        $region50: #{tpu_custom_call.1} parent=31 // pred_check_branch
          %441 = sbr.rel (%p439) target = $region52
        $region51: #{tpu_custom_call.1} parent=31 // pred_region
          %443 = dma.done [#allocation7], 32
        $region52: #{tpu_custom_call.1} parent=31 // pred_fallthru
          _
      $region32: #{tpu_custom_call.1} parent=5 // pred_fallthru
        _
      %p444 = scmp.le.s32.totalorder 2, %s13
      // Predicated region
      $region53: #{tpu_custom_call.1} parent=5 // pred_check
        %p445 = pneg %p444
      $region54: #{tpu_custom_call.1} parent=5 // pred_check_branch
        %447 = sbr.rel (%p445) target = $region56
      $region55: #{tpu_custom_call.1} parent=5 // pred_region
        %s448 = ssub.s32 %s13, 2
      $region56: #{tpu_custom_call.1} parent=5 // pred_fallthru
        _
    $region6: #{tpu_custom_call.1} parent=1 // loop_footer
      %s17 = sadd.s32 1, %s13
    $region7: #{tpu_custom_call.1} parent=1 // loop_footer_branch
      %12 = sbr.rel target = $region3
    $region8: #{tpu_custom_call.1} parent=1 // loop_exit
      _
    %449 = vsyncpa [#allocation6], 1
    %s450 = scalar_lea.sflag [#allocation6], 1
    %451 = vsyncpa %s450, 1
    %452 = vsyncpa [#allocation7], 1
    %s453 = scalar_lea.sflag [#allocation7], 1
    %454 = vsyncpa %s453, 1

</llo_original>
